<compile_context>
chip_gen: v7x
topology: tpu7x:2x2x1
jax: 0.10.0
libtpu: 0.0.40
codegen_flags: <defaults>
</compile_context>

<pallas_src>
import jax
import jax.numpy as jnp
from jax import lax
from jax.experimental import pallas as pl
from jax.experimental.pallas import tpu as pltpu

_MIB = 1024 * 1024


def _round_up(n, m):
    return ((n + m - 1) // m) * m


def _sublane_multiple(dtype):
    # f32 -> 8, bf16 -> 16, int8/fp8 -> 32 (sub-32-bit dtypes pack along sublanes).
    return 8 * max(1, 4 // jnp.dtype(dtype).itemsize)


def _vmem_capacity_bytes():
    try:
        return int(pltpu.get_tpu_info().vmem_capacity_bytes)
    except Exception:
        return 64 * _MIB  # conservative (v7x-sized) default


def _expansion_matrix(w, k, dtype):
    """Block-diagonal E of shape (k*W, 4*k*W).

    For each of the k packed image rows, a (W, 4W) block maps the W input columns
    to [row 2x-interleaved | same row again], i.e. y_row @ block =
    [repeat(y_row, 2), repeat(y_row, 2)].  One dot therefore performs both the
    2x nearest-neighbor W-duplication and the 2x H-duplication; every column has
    exactly one nonzero, so the dot is numerically exact.
    """
    wp, fp = k * w, 4 * k * w
    a = lax.broadcasted_iota(jnp.int32, (wp, fp), 0)
    b = lax.broadcasted_iota(jnp.int32, (wp, fp), 1)
    same_row = (a // w) == (b // (4 * w))
    same_col = (a % w) == ((b % (2 * w)) // 2)
    return (same_row & same_col).astype(dtype)


def _choose_pack_factor(H, W, max_packed_w=512):
    """Pick k (a divisor of H): pack k image rows into the lane dim so k*W is
    lane-dense while keeping H/k rows for sublane density; k*W is capped so the
    (k*W, 4*k*W) expansion matrix stays a few MiB."""
    if W >= 128:
        return 1
    cands = [k for k in range(1, H + 1) if H % k == 0 and k * W <= max_packed_w]
    if not cands:
        return 1

    def score(k):
        wp, hp = k * W, H // k
        lane_in = wp / _round_up(wp, 128)
        lane_out = (4 * wp) / _round_up(4 * wp, 128)
        sublane = min(hp, 8) / 8.0
        return (lane_in + 4.0 * lane_out) * sublane  # store traffic is 4x read

    return max(cands, key=score)


def _choose_tiles(N, C_in, C_out, Hp, Wp, x_dtype, out_dtype, compute_dtype,
                  tile_budget_bytes):
    """Pick (TH, TILE_CO) with padding-aware, double-buffered VMEM accounting."""
    x_item = jnp.dtype(x_dtype).itemsize
    o_item = jnp.dtype(out_dtype).itemsize
    e_item = jnp.dtype(compute_dtype).itemsize
    sub_x = _sublane_multiple(x_dtype)
    sub_o = _sublane_multiple(out_dtype)
    sub_e = _sublane_multiple(compute_dtype)
    lane_x = _round_up(Wp, 128)
    lane_o = _round_up(4 * Wp, 128)
    e_bytes = _round_up(Wp, sub_e) * _round_up(4 * Wp, 128) * e_item

    def footprint(th, co):
        x_tile = C_in * _round_up(th, sub_x) * lane_x * x_item
        o_tile = co * _round_up(th, sub_o) * lane_o * o_item
        # input/output tiles are double-buffered by the pipeline; count E twice
        # as well (it gets its own buffer pair even with a constant index_map).
        return 2 * (x_tile + o_tile) + 2 * e_bytes

    th_cands = sorted({t for t in range(8, Hp + 1, 8) if Hp % t == 0} | {Hp},
                      reverse=True)
    co_unroll_cap = 32  # bounds the per-step Python unroll over output channels
    co_cands = sorted({c for c in range(1, C_out + 1)
                       if C_out % c == 0 and c <= co_unroll_cap}, reverse=True)

    fitting = [(th, co) for th in th_cands for co in co_cands
               if footprint(th, co) <= tile_budget_bytes]
    if not fitting:
        # TODO(synk): prime/awkward Hp whose minimum legal tile is still too big
        # would need a masked-tail (cdiv) grid; fall back to the smallest tile.
        th, co = th_cands[-1], co_cands[-1]
    else:
        def steps(tc):
            t, c = tc
            return N * (Hp // t) * (C_out // c)
        # Prefer >= 4 grid steps (keeps both v7x TensorCores busy), then biggest tile.
        pool = [tc for tc in fitting if steps(tc) >= 4] or fitting
        th, co = max(pool, key=lambda tc: tc[0] * tc[1])
    return th, co, footprint(th, co)


def _up_kernel(x_ref, w_ref, b_ref, e_ref, o_ref):
    # x_ref: (1, C_in, TH, Wp)       VMEM, input dtype
    # w_ref: (C_out * C_in,)         SMEM, f32 (flattened 1x1-conv weight)
    # b_ref: (C_out,)                SMEM, f32
    # e_ref: (Wp, 4*Wp)              VMEM, compute dtype, constant across the grid
    # o_ref: (1, TILE_CO, TH, 4*Wp)  VMEM, output dtype
    _, c_in, _, _ = x_ref.shape
    tile_co = o_ref.shape[1]
    cdt = e_ref.dtype
    expand = e_ref[...]
    co0 = pl.program_id(2) * tile_co

    for co in range(tile_co):
        w_base = (co0 + co) * c_in

        def fma(ci, acc):
            return acc + x_ref[0, ci].astype(cdt) * w_ref[w_base + ci].astype(cdt)

        # 1x1 conv for this output channel: VPU multiply-adds over C_in,
        # re-reading x_ref per term (no prematerialized plane list).
        y = x_ref[0, 0].astype(cdt) * w_ref[w_base].astype(cdt)
        if c_in <= 16:
            for ci in range(1, c_in):
                y = fma(ci, y)
        else:
            y = lax.fori_loop(1, c_in, fma, y)
        y = y + b_ref[co0 + co].astype(cdt)

        # 2x-W interleave + 2x-H duplication in one MXU dot; single full-width,
        # lane-aligned store per channel.
        up = jnp.dot(y, expand, preferred_element_type=jnp.float32)
        o_ref[0, co] = up.astype(o_ref.dtype)


def up_forward(x_nchw, weight_oi, bias_o):
    """nn.Conv2d(C_in, C_out, kernel_size=1, bias=True) + nn.Upsample(2x, 'nearest').

    x_nchw: (N, C_in, H, W); weight_oi: (C_out, C_in) (torch weight squeezed);
    bias_o: (C_out,).  NCHW in, NCHW out: (N, C_out, 2H, 2W).
    """
    N, C_in, H, W = x_nchw.shape
    C_out = weight_oi.shape[0]
    out_dtype = x_nchw.dtype
    # bf16 stays bf16 on the VPU/MXU (native on v6e/v7x; expansion dot is exact).
    # TODO(synk): force f32 compute on v5e (no bf16 VPU there).
    compute_dtype = jnp.bfloat16 if x_nchw.dtype == jnp.bfloat16 else jnp.float32

    # --- lane packing: (N, C_in, H, W) -> (N, C_in, Hp, Wp), free reshape --------
    k = _choose_pack_factor(H, W)
    Hp, Wp = H // k, k * W
    x_packed = x_nchw.reshape(N, C_in, Hp, Wp)

    # --- per-generation VMEM budget / tile choice --------------------------------
    vmem_cap = _vmem_capacity_bytes()
    vmem_limit = int(min(vmem_cap * 0.75, 96 * _MIB))  # ~96 MiB v5e/v6e, ~48 MiB v7x
    tile_budget = int(vmem_limit * 0.70)
    TH, TILE_CO, footprint = _choose_tiles(
        N, C_in, C_out, Hp, Wp, x_packed.dtype, out_dtype, compute_dtype, tile_budget)
    vmem_limit = max(vmem_limit, min(footprint + 4 * _MIB, vmem_cap))

    grid = (N, Hp // TH, C_out // TILE_CO)  # co innermost: x tile reused across co

    E = _expansion_matrix(W, k, compute_dtype)
    w_flat = weight_oi.reshape(-1).astype(jnp.float32)
    b_f32 = bias_o.astype(jnp.float32)
    # TODO(synk): very large C_in*C_out will not fit SMEM; that regime wants a
    # VMEM-resident weight tile and a whole-tile MXU dot contracting C_in.

    x_spec = pl.BlockSpec((1, C_in, TH, Wp), lambda n, t, c: (n, 0, t, 0))
    w_spec = pl.BlockSpec(memory_space=pltpu.MemorySpace.SMEM)
    b_spec = pl.BlockSpec(memory_space=pltpu.MemorySpace.SMEM)
    e_spec = pl.BlockSpec((Wp, 4 * Wp), lambda n, t, c: (0, 0))
    o_spec = pl.BlockSpec((1, TILE_CO, TH, 4 * Wp), lambda n, t, c: (n, c, t, 0))
    # NOTE: if profiling ever shows the input DMA exposed after tile growth, add
    # pipeline_mode=pl.Buffered(3) to x_spec (input is 4x smaller than the output).

    out = pl.pallas_call(
        _up_kernel,
        out_shape=jax.ShapeDtypeStruct((N, C_out, Hp, 4 * Wp), out_dtype),
        grid_spec=pltpu.PrefetchScalarGridSpec(
            num_scalar_prefetch=0,
            grid=grid,
            in_specs=[x_spec, w_spec, b_spec, e_spec],
            out_specs=o_spec,
        ),
        compiler_params=pltpu.CompilerParams(
            dimension_semantics=("parallel", "parallel", "parallel"),
            vmem_limit_bytes=int(vmem_limit),
        ),
    )(x_packed, w_flat, b_f32, E)

    # (Hp, 4*Wp) == (Hp, k, 2, 2W) -> (2H, 2W): contiguous, free reshape.
    return out.reshape(N, C_out, 2 * H, 2 * W)


def up_reference(x_nchw, weight_oi, bias_o):
    """Pure-JAX reference for nn.Conv2d(k=1) + nn.Upsample(2, 'nearest')."""
    y = jnp.einsum("nchw,oc->nohw", x_nchw, weight_oi,
                   precision=lax.Precision.HIGHEST)
    y = y + bias_o[None, :, None, None]
    y = jnp.repeat(y, 2, axis=2)
    y = jnp.repeat(y, 2, axis=3)
    return y


if __name__ == "__main__":
    key = jax.random.PRNGKey(0)
    k_x, k_w, k_b = jax.random.split(key, 3)

    N, C_in, C_out, H, W = 2, 4, 8, 16, 16

    x = jax.random.normal(k_x, (N, C_in, H, W), dtype=jnp.float32)
    # torch Conv2d weight is (C_out, C_in, 1, 1); carried here as (C_out, C_in).
    weight = jax.random.normal(k_w, (C_out, C_in), dtype=jnp.float32) * 0.1
    bias = jax.random.normal(k_b, (C_out,), dtype=jnp.float32) * 0.1

    out = jax.block_until_ready(up_forward(x, weight, bias))
    ref = up_reference(x, weight, bias)

    assert out.shape == (N, C_out, 2 * H, 2 * W), out.shape
    assert jnp.allclose(out, ref, atol=1e-5, rtol=1e-5), "mismatch vs reference"

    print("KERNEL_OK")
</pallas_src>

<mosaic_0001>
module attributes {stable_mosaic.version = 11 : i64} {
  func.func @_up_kernel(%arg0: i32, %arg1: i32, %arg2: i32, %arg3: memref<1x4x8x32xf32, #tpu.memory_space<vmem>>, %arg4: memref<32xf32, #tpu.memory_space<smem>>, %arg5: memref<8xf32, #tpu.memory_space<smem>>, %arg6: memref<32x128xf32, #tpu.memory_space<vmem>>, %arg7: memref<1x4x8x128xf32, #tpu.memory_space<vmem>>) attributes {dimension_semantics = [#tpu.dimension_semantics<parallel>, #tpu.dimension_semantics<parallel>, #tpu.dimension_semantics<parallel>], iteration_bounds = array<i64: 2, 1, 2>, scalar_prefetch = 0 : i64, scratch_operands = 0 : i64, tpu.core_type = #tpu.core_type<tc>, window_params = [{transform_indices = @transform_0, window_bounds = array<i64: 1, 4, 8, 32>}, {transform_indices = @transform_1, window_bounds = array<i64: 32>}, {transform_indices = @transform_2, window_bounds = array<i64: 8>}, {pipeline_mode = #tpu.pipeline_mode<synchronous>, transform_indices = @transform_3, window_bounds = array<i64: 32, 128>}, {transform_indices = @transform_4, window_bounds = array<i64: 1, 4, 8, 128>}]} {
    %c0 = arith.constant 0 : index
    %c0_0 = arith.constant 0 : index
    %0 = vector.load %arg6[%c0, %c0_0] : memref<32x128xf32, #tpu.memory_space<vmem>>, vector<32x128xf32>
    %c4_i32 = arith.constant 4 : i32
    %1 = arith.muli %arg2, %c4_i32 : i32
    %c0_i32 = arith.constant 0 : i32
    %2 = arith.addi %1, %c0_i32 : i32
    %c4_i32_1 = arith.constant 4 : i32
    %3 = arith.muli %2, %c4_i32_1 : i32
    %c0_2 = arith.constant 0 : index
    %c0_3 = arith.constant 0 : index
    %c0_4 = arith.constant 0 : index
    %c0_5 = arith.constant 0 : index
    %4 = vector.load %arg3[%c0_2, %c0_3, %c0_4, %c0_5] : memref<1x4x8x32xf32, #tpu.memory_space<vmem>>, vector<1x1x8x32xf32>
    %5 = vector.shape_cast %4 : vector<1x1x8x32xf32> to vector<8x32xf32>
    %6 = arith.index_cast %3 : i32 to index
    %7 = memref.load %arg4[%6] : memref<32xf32, #tpu.memory_space<smem>>
    %8 = vector.broadcast %7 : f32 to vector<8x32xf32>
    %9 = arith.mulf %5, %8 : vector<8x32xf32>
    %c0_6 = arith.constant 0 : index
    %c1 = arith.constant 1 : index
    %c0_7 = arith.constant 0 : index
    %c0_8 = arith.constant 0 : index
    %10 = vector.load %arg3[%c0_6, %c1, %c0_7, %c0_8] : memref<1x4x8x32xf32, #tpu.memory_space<vmem>>, vector<1x1x8x32xf32>
    %11 = vector.shape_cast %10 : vector<1x1x8x32xf32> to vector<8x32xf32>
    %c1_i32 = arith.constant 1 : i32
    %12 = arith.addi %3, %c1_i32 : i32
    %13 = arith.index_cast %12 : i32 to index
    %14 = memref.load %arg4[%13] : memref<32xf32, #tpu.memory_space<smem>>
    %15 = vector.broadcast %14 : f32 to vector<8x32xf32>
    %16 = arith.mulf %11, %15 : vector<8x32xf32>
    %17 = arith.addf %9, %16 : vector<8x32xf32>
    %c0_9 = arith.constant 0 : index
    %c2 = arith.constant 2 : index
    %c0_10 = arith.constant 0 : index
    %c0_11 = arith.constant 0 : index
    %18 = vector.load %arg3[%c0_9, %c2, %c0_10, %c0_11] : memref<1x4x8x32xf32, #tpu.memory_space<vmem>>, vector<1x1x8x32xf32>
    %19 = vector.shape_cast %18 : vector<1x1x8x32xf32> to vector<8x32xf32>
    %c2_i32 = arith.constant 2 : i32
    %20 = arith.addi %3, %c2_i32 : i32
    %21 = arith.index_cast %20 : i32 to index
    %22 = memref.load %arg4[%21] : memref<32xf32, #tpu.memory_space<smem>>
    %23 = vector.broadcast %22 : f32 to vector<8x32xf32>
    %24 = arith.mulf %19, %23 : vector<8x32xf32>
    %25 = arith.addf %17, %24 : vector<8x32xf32>
    %c0_12 = arith.constant 0 : index
    %c3 = arith.constant 3 : index
    %c0_13 = arith.constant 0 : index
    %c0_14 = arith.constant 0 : index
    %26 = vector.load %arg3[%c0_12, %c3, %c0_13, %c0_14] : memref<1x4x8x32xf32, #tpu.memory_space<vmem>>, vector<1x1x8x32xf32>
    %27 = vector.shape_cast %26 : vector<1x1x8x32xf32> to vector<8x32xf32>
    %c3_i32 = arith.constant 3 : i32
    %28 = arith.addi %3, %c3_i32 : i32
    %29 = arith.index_cast %28 : i32 to index
    %30 = memref.load %arg4[%29] : memref<32xf32, #tpu.memory_space<smem>>
    %31 = vector.broadcast %30 : f32 to vector<8x32xf32>
    %32 = arith.mulf %27, %31 : vector<8x32xf32>
    %33 = arith.addf %25, %32 : vector<8x32xf32>
    %c0_i32_15 = arith.constant 0 : i32
    %34 = arith.addi %1, %c0_i32_15 : i32
    %35 = arith.index_cast %34 : i32 to index
    %36 = memref.load %arg5[%35] : memref<8xf32, #tpu.memory_space<smem>>
    %37 = vector.broadcast %36 : f32 to vector<8x32xf32>
    %38 = arith.addf %33, %37 : vector<8x32xf32>
    %cst = arith.constant dense<0.000000e+00> : vector<8x128xf32>
    %39 = tpu.matmul %38, %0, %cst {dimension_numbers = #tpu.dot_dimension_numbers<[1], [0], [0], [1], [0, 0, 1, 1], [], []>} : vector<8x32xf32>, vector<32x128xf32>, vector<8x128xf32> -> vector<8x128xf32>
    %c0_16 = arith.constant 0 : index
    %c0_17 = arith.constant 0 : index
    %c0_18 = arith.constant 0 : index
    %c0_19 = arith.constant 0 : index
    %40 = vector.load %arg7[%c0_16, %c0_17, %c0_18, %c0_19] : memref<1x4x8x128xf32, #tpu.memory_space<vmem>>, vector<1x1x8x128xf32>
    %41 = vector.shape_cast %40 : vector<1x1x8x128xf32> to vector<8x128xf32>
    %42 = vector.shape_cast %39 : vector<8x128xf32> to vector<1x1x8x128xf32>
    tpu.vector_store %arg7[%c0_16, %c0_17, %c0_18, %c0_19], %42 {strides = array<i32>} : memref<1x4x8x128xf32, #tpu.memory_space<vmem>>, vector<1x1x8x128xf32>,
    %c1_i32_20 = arith.constant 1 : i32
    %43 = arith.addi %1, %c1_i32_20 : i32
    %c4_i32_21 = arith.constant 4 : i32
    %44 = arith.muli %43, %c4_i32_21 : i32
    %c0_22 = arith.constant 0 : index
    %c0_23 = arith.constant 0 : index
    %c0_24 = arith.constant 0 : index
    %c0_25 = arith.constant 0 : index
    %45 = vector.load %arg3[%c0_22, %c0_23, %c0_24, %c0_25] : memref<1x4x8x32xf32, #tpu.memory_space<vmem>>, vector<1x1x8x32xf32>
    %46 = vector.shape_cast %45 : vector<1x1x8x32xf32> to vector<8x32xf32>
    %47 = arith.index_cast %44 : i32 to index
    %48 = memref.load %arg4[%47] : memref<32xf32, #tpu.memory_space<smem>>
    %49 = vector.broadcast %48 : f32 to vector<8x32xf32>
    %50 = arith.mulf %46, %49 : vector<8x32xf32>
    %c0_26 = arith.constant 0 : index
    %c1_27 = arith.constant 1 : index
    %c0_28 = arith.constant 0 : index
    %c0_29 = arith.constant 0 : index
    %51 = vector.load %arg3[%c0_26, %c1_27, %c0_28, %c0_29] : memref<1x4x8x32xf32, #tpu.memory_space<vmem>>, vector<1x1x8x32xf32>
    %52 = vector.shape_cast %51 : vector<1x1x8x32xf32> to vector<8x32xf32>
    %c1_i32_30 = arith.constant 1 : i32
    %53 = arith.addi %44, %c1_i32_30 : i32
    %54 = arith.index_cast %53 : i32 to index
    %55 = memref.load %arg4[%54] : memref<32xf32, #tpu.memory_space<smem>>
    %56 = vector.broadcast %55 : f32 to vector<8x32xf32>
    %57 = arith.mulf %52, %56 : vector<8x32xf32>
    %58 = arith.addf %50, %57 : vector<8x32xf32>
    %c0_31 = arith.constant 0 : index
    %c2_32 = arith.constant 2 : index
    %c0_33 = arith.constant 0 : index
    %c0_34 = arith.constant 0 : index
    %59 = vector.load %arg3[%c0_31, %c2_32, %c0_33, %c0_34] : memref<1x4x8x32xf32, #tpu.memory_space<vmem>>, vector<1x1x8x32xf32>
    %60 = vector.shape_cast %59 : vector<1x1x8x32xf32> to vector<8x32xf32>
    %c2_i32_35 = arith.constant 2 : i32
    %61 = arith.addi %44, %c2_i32_35 : i32
    %62 = arith.index_cast %61 : i32 to index
    %63 = memref.load %arg4[%62] : memref<32xf32, #tpu.memory_space<smem>>
    %64 = vector.broadcast %63 : f32 to vector<8x32xf32>
    %65 = arith.mulf %60, %64 : vector<8x32xf32>
    %66 = arith.addf %58, %65 : vector<8x32xf32>
    %c0_36 = arith.constant 0 : index
    %c3_37 = arith.constant 3 : index
    %c0_38 = arith.constant 0 : index
    %c0_39 = arith.constant 0 : index
    %67 = vector.load %arg3[%c0_36, %c3_37, %c0_38, %c0_39] : memref<1x4x8x32xf32, #tpu.memory_space<vmem>>, vector<1x1x8x32xf32>
    %68 = vector.shape_cast %67 : vector<1x1x8x32xf32> to vector<8x32xf32>
    %c3_i32_40 = arith.constant 3 : i32
    %69 = arith.addi %44, %c3_i32_40 : i32
    %70 = arith.index_cast %69 : i32 to index
    %71 = memref.load %arg4[%70] : memref<32xf32, #tpu.memory_space<smem>>
    %72 = vector.broadcast %71 : f32 to vector<8x32xf32>
    %73 = arith.mulf %68, %72 : vector<8x32xf32>
    %74 = arith.addf %66, %73 : vector<8x32xf32>
    %c1_i32_41 = arith.constant 1 : i32
    %75 = arith.addi %1, %c1_i32_41 : i32
    %76 = arith.index_cast %75 : i32 to index
    %77 = memref.load %arg5[%76] : memref<8xf32, #tpu.memory_space<smem>>
    %78 = vector.broadcast %77 : f32 to vector<8x32xf32>
    %79 = arith.addf %74, %78 : vector<8x32xf32>
    %cst_42 = arith.constant dense<0.000000e+00> : vector<8x128xf32>
    %80 = tpu.matmul %79, %0, %cst_42 {dimension_numbers = #tpu.dot_dimension_numbers<[1], [0], [0], [1], [0, 0, 1, 1], [], []>} : vector<8x32xf32>, vector<32x128xf32>, vector<8x128xf32> -> vector<8x128xf32>
    %c0_43 = arith.constant 0 : index
    %c1_44 = arith.constant 1 : index
    %c0_45 = arith.constant 0 : index
    %c0_46 = arith.constant 0 : index
    %81 = vector.load %arg7[%c0_43, %c1_44, %c0_45, %c0_46] : memref<1x4x8x128xf32, #tpu.memory_space<vmem>>, vector<1x1x8x128xf32>
    %82 = vector.shape_cast %81 : vector<1x1x8x128xf32> to vector<8x128xf32>
    %83 = vector.shape_cast %80 : vector<8x128xf32> to vector<1x1x8x128xf32>
    tpu.vector_store %arg7[%c0_43, %c1_44, %c0_45, %c0_46], %83 {strides = array<i32>} : memref<1x4x8x128xf32, #tpu.memory_space<vmem>>, vector<1x1x8x128xf32>,
    %c2_i32_47 = arith.constant 2 : i32
    %84 = arith.addi %1, %c2_i32_47 : i32
    %c4_i32_48 = arith.constant 4 : i32
    %85 = arith.muli %84, %c4_i32_48 : i32
    %c0_49 = arith.constant 0 : index
    %c0_50 = arith.constant 0 : index
    %c0_51 = arith.constant 0 : index
    %c0_52 = arith.constant 0 : index
    %86 = vector.load %arg3[%c0_49, %c0_50, %c0_51, %c0_52] : memref<1x4x8x32xf32, #tpu.memory_space<vmem>>, vector<1x1x8x32xf32>
    %87 = vector.shape_cast %86 : vector<1x1x8x32xf32> to vector<8x32xf32>
    %88 = arith.index_cast %85 : i32 to index
    %89 = memref.load %arg4[%88] : memref<32xf32, #tpu.memory_space<smem>>
    %90 = vector.broadcast %89 : f32 to vector<8x32xf32>
    %91 = arith.mulf %87, %90 : vector<8x32xf32>
    %c0_53 = arith.constant 0 : index
    %c1_54 = arith.constant 1 : index
    %c0_55 = arith.constant 0 : index
    %c0_56 = arith.constant 0 : index
    %92 = vector.load %arg3[%c0_53, %c1_54, %c0_55, %c0_56] : memref<1x4x8x32xf32, #tpu.memory_space<vmem>>, vector<1x1x8x32xf32>
    %93 = vector.shape_cast %92 : vector<1x1x8x32xf32> to vector<8x32xf32>
    %c1_i32_57 = arith.constant 1 : i32
    %94 = arith.addi %85, %c1_i32_57 : i32
    %95 = arith.index_cast %94 : i32 to index
    %96 = memref.load %arg4[%95] : memref<32xf32, #tpu.memory_space<smem>>
    %97 = vector.broadcast %96 : f32 to vector<8x32xf32>
    %98 = arith.mulf %93, %97 : vector<8x32xf32>
    %99 = arith.addf %91, %98 : vector<8x32xf32>
    %c0_58 = arith.constant 0 : index
    %c2_59 = arith.constant 2 : index
    %c0_60 = arith.constant 0 : index
    %c0_61 = arith.constant 0 : index
    %100 = vector.load %arg3[%c0_58, %c2_59, %c0_60, %c0_61] : memref<1x4x8x32xf32, #tpu.memory_space<vmem>>, vector<1x1x8x32xf32>
    %101 = vector.shape_cast %100 : vector<1x1x8x32xf32> to vector<8x32xf32>
    %c2_i32_62 = arith.constant 2 : i32
    %102 = arith.addi %85, %c2_i32_62 : i32
    %103 = arith.index_cast %102 : i32 to index
    %104 = memref.load %arg4[%103] : memref<32xf32, #tpu.memory_space<smem>>
    %105 = vector.broadcast %104 : f32 to vector<8x32xf32>
    %106 = arith.mulf %101, %105 : vector<8x32xf32>
    %107 = arith.addf %99, %106 : vector<8x32xf32>
    %c0_63 = arith.constant 0 : index
    %c3_64 = arith.constant 3 : index
    %c0_65 = arith.constant 0 : index
    %c0_66 = arith.constant 0 : index
    %108 = vector.load %arg3[%c0_63, %c3_64, %c0_65, %c0_66] : memref<1x4x8x32xf32, #tpu.memory_space<vmem>>, vector<1x1x8x32xf32>
    %109 = vector.shape_cast %108 : vector<1x1x8x32xf32> to vector<8x32xf32>
    %c3_i32_67 = arith.constant 3 : i32
    %110 = arith.addi %85, %c3_i32_67 : i32
    %111 = arith.index_cast %110 : i32 to index
    %112 = memref.load %arg4[%111] : memref<32xf32, #tpu.memory_space<smem>>
    %113 = vector.broadcast %112 : f32 to vector<8x32xf32>
    %114 = arith.mulf %109, %113 : vector<8x32xf32>
    %115 = arith.addf %107, %114 : vector<8x32xf32>
    %c2_i32_68 = arith.constant 2 : i32
    %116 = arith.addi %1, %c2_i32_68 : i32
    %117 = arith.index_cast %116 : i32 to index
    %118 = memref.load %arg5[%117] : memref<8xf32, #tpu.memory_space<smem>>
    %119 = vector.broadcast %118 : f32 to vector<8x32xf32>
    %120 = arith.addf %115, %119 : vector<8x32xf32>
    %cst_69 = arith.constant dense<0.000000e+00> : vector<8x128xf32>
    %121 = tpu.matmul %120, %0, %cst_69 {dimension_numbers = #tpu.dot_dimension_numbers<[1], [0], [0], [1], [0, 0, 1, 1], [], []>} : vector<8x32xf32>, vector<32x128xf32>, vector<8x128xf32> -> vector<8x128xf32>
    %c0_70 = arith.constant 0 : index
    %c2_71 = arith.constant 2 : index
    %c0_72 = arith.constant 0 : index
    %c0_73 = arith.constant 0 : index
    %122 = vector.load %arg7[%c0_70, %c2_71, %c0_72, %c0_73] : memref<1x4x8x128xf32, #tpu.memory_space<vmem>>, vector<1x1x8x128xf32>
    %123 = vector.shape_cast %122 : vector<1x1x8x128xf32> to vector<8x128xf32>
    %124 = vector.shape_cast %121 : vector<8x128xf32> to vector<1x1x8x128xf32>
    tpu.vector_store %arg7[%c0_70, %c2_71, %c0_72, %c0_73], %124 {strides = array<i32>} : memref<1x4x8x128xf32, #tpu.memory_space<vmem>>, vector<1x1x8x128xf32>,
    %c3_i32_74 = arith.constant 3 : i32
    %125 = arith.addi %1, %c3_i32_74 : i32
    %c4_i32_75 = arith.constant 4 : i32
    %126 = arith.muli %125, %c4_i32_75 : i32
    %c0_76 = arith.constant 0 : index
    %c0_77 = arith.constant 0 : index
    %c0_78 = arith.constant 0 : index
    %c0_79 = arith.constant 0 : index
    %127 = vector.load %arg3[%c0_76, %c0_77, %c0_78, %c0_79] : memref<1x4x8x32xf32, #tpu.memory_space<vmem>>, vector<1x1x8x32xf32>
    %128 = vector.shape_cast %127 : vector<1x1x8x32xf32> to vector<8x32xf32>
    %129 = arith.index_cast %126 : i32 to index
    %130 = memref.load %arg4[%129] : memref<32xf32, #tpu.memory_space<smem>>
    %131 = vector.broadcast %130 : f32 to vector<8x32xf32>
    %132 = arith.mulf %128, %131 : vector<8x32xf32>
    %c0_80 = arith.constant 0 : index
    %c1_81 = arith.constant 1 : index
    %c0_82 = arith.constant 0 : index
    %c0_83 = arith.constant 0 : index
    %133 = vector.load %arg3[%c0_80, %c1_81, %c0_82, %c0_83] : memref<1x4x8x32xf32, #tpu.memory_space<vmem>>, vector<1x1x8x32xf32>
    %134 = vector.shape_cast %133 : vector<1x1x8x32xf32> to vector<8x32xf32>
    %c1_i32_84 = arith.constant 1 : i32
    %135 = arith.addi %126, %c1_i32_84 : i32
    %136 = arith.index_cast %135 : i32 to index
    %137 = memref.load %arg4[%136] : memref<32xf32, #tpu.memory_space<smem>>
    %138 = vector.broadcast %137 : f32 to vector<8x32xf32>
    %139 = arith.mulf %134, %138 : vector<8x32xf32>
    %140 = arith.addf %132, %139 : vector<8x32xf32>
    %c0_85 = arith.constant 0 : index
    %c2_86 = arith.constant 2 : index
    %c0_87 = arith.constant 0 : index
    %c0_88 = arith.constant 0 : index
    %141 = vector.load %arg3[%c0_85, %c2_86, %c0_87, %c0_88] : memref<1x4x8x32xf32, #tpu.memory_space<vmem>>, vector<1x1x8x32xf32>
    %142 = vector.shape_cast %141 : vector<1x1x8x32xf32> to vector<8x32xf32>
    %c2_i32_89 = arith.constant 2 : i32
    %143 = arith.addi %126, %c2_i32_89 : i32
    %144 = arith.index_cast %143 : i32 to index
    %145 = memref.load %arg4[%144] : memref<32xf32, #tpu.memory_space<smem>>
    %146 = vector.broadcast %145 : f32 to vector<8x32xf32>
    %147 = arith.mulf %142, %146 : vector<8x32xf32>
    %148 = arith.addf %140, %147 : vector<8x32xf32>
    %c0_90 = arith.constant 0 : index
    %c3_91 = arith.constant 3 : index
    %c0_92 = arith.constant 0 : index
    %c0_93 = arith.constant 0 : index
    %149 = vector.load %arg3[%c0_90, %c3_91, %c0_92, %c0_93] : memref<1x4x8x32xf32, #tpu.memory_space<vmem>>, vector<1x1x8x32xf32>
    %150 = vector.shape_cast %149 : vector<1x1x8x32xf32> to vector<8x32xf32>
    %c3_i32_94 = arith.constant 3 : i32
    %151 = arith.addi %126, %c3_i32_94 : i32
    %152 = arith.index_cast %151 : i32 to index
    %153 = memref.load %arg4[%152] : memref<32xf32, #tpu.memory_space<smem>>
    %154 = vector.broadcast %153 : f32 to vector<8x32xf32>
    %155 = arith.mulf %150, %154 : vector<8x32xf32>
    %156 = arith.addf %148, %155 : vector<8x32xf32>
    %c3_i32_95 = arith.constant 3 : i32
    %157 = arith.addi %1, %c3_i32_95 : i32
    %158 = arith.index_cast %157 : i32 to index
    %159 = memref.load %arg5[%158] : memref<8xf32, #tpu.memory_space<smem>>
    %160 = vector.broadcast %159 : f32 to vector<8x32xf32>
    %161 = arith.addf %156, %160 : vector<8x32xf32>
    %cst_96 = arith.constant dense<0.000000e+00> : vector<8x128xf32>
    %162 = tpu.matmul %161, %0, %cst_96 {dimension_numbers = #tpu.dot_dimension_numbers<[1], [0], [0], [1], [0, 0, 1, 1], [], []>} : vector<8x32xf32>, vector<32x128xf32>, vector<8x128xf32> -> vector<8x128xf32>
    %c0_97 = arith.constant 0 : index
    %c3_98 = arith.constant 3 : index
    %c0_99 = arith.constant 0 : index
    %c0_100 = arith.constant 0 : index
    %163 = vector.load %arg7[%c0_97, %c3_98, %c0_99, %c0_100] : memref<1x4x8x128xf32, #tpu.memory_space<vmem>>, vector<1x1x8x128xf32>
    %164 = vector.shape_cast %163 : vector<1x1x8x128xf32> to vector<8x128xf32>
    %165 = vector.shape_cast %162 : vector<8x128xf32> to vector<1x1x8x128xf32>
    tpu.vector_store %arg7[%c0_97, %c3_98, %c0_99, %c0_100], %165 {strides = array<i32>} : memref<1x4x8x128xf32, #tpu.memory_space<vmem>>, vector<1x1x8x128xf32>,
    return
  }
  func.func @transform_0(%arg0: i32, %arg1: i32, %arg2: i32) -> (i32, i32, i32, i32) {
    %c0_i32 = arith.constant 0 : i32
    %c0_i32_0 = arith.constant 0 : i32
    %c0_i32_1 = arith.constant 0 : i32
    return %arg0, %c0_i32, %arg1, %c0_i32_0 : i32, i32, i32, i32
  }
  func.func @transform_1(%arg0: i32, %arg1: i32, %arg2: i32) -> i32 {
    %c0_i32 = arith.constant 0 : i32
    %c0_i32_0 = arith.constant 0 : i32
    return %c0_i32 : i32
  }
  func.func @transform_2(%arg0: i32, %arg1: i32, %arg2: i32) -> i32 {
    %c0_i32 = arith.constant 0 : i32
    %c0_i32_0 = arith.constant 0 : i32
    return %c0_i32 : i32
  }
  func.func @transform_3(%arg0: i32, %arg1: i32, %arg2: i32) -> (i32, i32) {
    %c0_i32 = arith.constant 0 : i32
    %c0_i32_0 = arith.constant 0 : i32
    %c0_i32_1 = arith.constant 0 : i32
    return %c0_i32, %c0_i32_0 : i32, i32
  }
  func.func @transform_4(%arg0: i32, %arg1: i32, %arg2: i32) -> (i32, i32, i32, i32) {
    %c0_i32 = arith.constant 0 : i32
    %c0_i32_0 = arith.constant 0 : i32
    return %arg0, %arg2, %arg1, %c0_i32 : i32, i32, i32, i32
  }
}

</mosaic_0001>

<llo_original>
// kernel: tpu_custom_call.1
$region0: #{tpu_custom_call.1}
  #allocation0 [shape = 'u32[]', space=smem, size = 0x4, offset = 0x4, fixed_abs, tag = 'smem constant byte address 0x4 - core index']
  #allocation1 [shape = 'u32[144,128]{1,0:T(1,128)}', space=vmem, size = 0x12000, scoped, tag = 'internal scratch']
  %s0 = inlined_call_operand.hbm [shape: f32[2,4,8,32], index: 0, kind: input, shape index: {}]
  %s1 = inlined_call_operand.vmem [shape: f32[32], index: 1, kind: input, shape index: {}]
  %s2 = inlined_call_operand.vmem [shape: f32[8], index: 2, kind: input, shape index: {}]
  %s3 = inlined_call_operand.hbm [shape: f32[32,128], index: 3, kind: input, shape index: {}]
  %s4 = inlined_call_operand.hbm [shape: f32[2,8,8,128], index: 4, kind: output, shape index: {}]
  %s5 = sld [smem:[#allocation0]]
  $region65: #{tpu_custom_call.1} parent=0
    _
  %s7 = ssub.s32 1, %s5
  %s8 = scalar_select 0, %s7, %s5
  $region1: #{tpu_custom_call.1} parent=0
    #allocation2 [shape = 'u8[32768]{0}', space=vmem, size = 0x8000, scoped, tag = 'input window, operand 0']
    #allocation3 [shape = 's32[2]{0}', space=sflag, size = 0x8, scoped, tag = 'scoped memory for tpu_custom_call.1']
    #allocation4 [shape = 's32[2]{0}', space=sflag, size = 0x8, scoped, tag = 'scoped memory for tpu_custom_call.1']
    #allocation5 [shape = 's32[2]{0}', space=sflag, size = 0x8, scoped, tag = 'scoped memory for tpu_custom_call.1']
    #allocation6 [shape = 'u8[512]{0}', space=smem, size = 0x200, scoped, tag = 'input window, operand 1, single buffered']
    #allocation7 [shape = 'u8[512]{0}', space=smem, size = 0x200, scoped, tag = 'input window, operand 2, single buffered']
    #allocation8 [shape = 's32[1]{0}', space=sflag, size = 0x4, scoped, tag = 'scoped memory for tpu_custom_call.1']
    #allocation9 [shape = 'u8[16384]{0}', space=vmem, size = 0x4000, scoped, tag = 'input window, operand 3, single buffered']
    #allocation10 [shape = 's32[1]{0}', space=sflag, size = 0x4, scoped, tag = 'scoped memory for tpu_custom_call.1']
    #allocation11 [shape = 'u8[32768]{0}', space=vmem, size = 0x8000, scoped, tag = 'output window, operand 0']
    %9 = vsyncpa [#allocation3], 0
    %s10 = scalar_lea.sflag [#allocation3], 1
    %11 = vsyncpa %s10, 0
    %12 = vsyncpa [#allocation5], 0
    %13 = vsyncpa [#allocation8], 0
    %14 = vsyncpa [#allocation10], 0
    %15 = vsyncpa [#allocation4], 0
    %s16 = scalar_lea.sflag [#allocation4], 1
    %17 = vsyncpa %s16, 0
    loop: start=0, step=1, limit=6
    $region2: #{tpu_custom_call.1} parent=1 // loop_pre_header
      _
    $region3: #{tpu_custom_call.1} parent=1 // loop_header
      %s19 = sphi 0, %s23
      %p20 = scmp.ge.s32.totalorder %s19, 6
      %s26 = sphi 0, %s45
      %s27 = sphi 0, %s41
      %s28 = sphi 0, %s37
      %s29 = sphi 0, %s26
      %s30 = sphi 0, %s27
      %s31 = sphi 0, %s28
      %s32 = sphi 0, %s29
      %s33 = sphi 0, %s30
      %s34 = sphi 0, %s31
      %s50 = sphi 0, %s52
      %s53 = sphi 0, %s50
      %s54 = sphi 0, %s53
      %s70 = sphi 0, %s54
      %s74 = sphi 0, %s74
      %s76 = sphi 0, %s74
      %s77 = sphi 0, %s76
      %s91 = sphi 0, %s77
      %s95 = sphi 0, %s95
      %s97 = sphi 0, %s95
      %s98 = sphi 0, %s97
      %s112 = sphi 0, %s98
      %s116 = sphi 0, %s116
      %s118 = sphi 0, %s116
      %s119 = sphi 0, %s118
      %s133 = sphi 0, %s119
      %s143 = sphi 0, %s145
      %s146 = sphi 0, %s143
      %s147 = sphi 0, %s146
      %s163 = sphi 0, %s147
    $region4: #{tpu_custom_call.1} parent=1 // loop_header_branch
      %22 = sbr.rel (%p20) target = $region8
    $region5: #{tpu_custom_call.1} parent=1 // loop_body
      %s24 = ssub.s32 %s19, 1
      %s25 = ssub.s32 %s19, 2
      %s35 = sadd.s32 1, %s28
      %p36 = scmp.ge.s32.totalorder %s35, 2
      %s37 = scalar_select %p36, 0, %s35
      %s38 = sadd.s32 1, %s27
      %s39 = scalar_select %p36, %s38, %s27
      %p40 = scmp.ge.s32.totalorder %s39, 1
      %s41 = scalar_select %p40, 0, %s39
      %s42 = sadd.s32 1, %s26
      %s43 = scalar_select %p40, %s42, %s26
      %p44 = scmp.ge.s32.totalorder %s43, 2
      %s45 = scalar_select %p44, 0, %s43
      %s46 = ssub.s32 %s26, %s45
      %s47 = ssub.s32 %s27, %s41
      %s48 = sor.u32 %s46, %s47
      %p49 = scmp.eq.s32.totalorder %s48, 0
      %s51 = sadd.s32 %s50, 1
      %s52 = scalar_select %p49, %s50, %s51
      %p55 = pneg %p49
      %p56 = scmp.eq.s32.totalorder %s19, 3
      %p57 = por %p55, %p56
      %p58 = scmp.ne.s32.totalorder %s50, %s53
      %p59 = scmp.eq.s32.totalorder %s19, 0
      %p60 = por %p58, %p59
      %p61 = scmp.ne.s32.totalorder %s50, %s53
      %p62 = scmp.eq.s32.totalorder %s24, 3
      %p63 = por %p61, %p62
      %p64 = scmp.ne.s32.totalorder %s53, %s54
      %p65 = scmp.eq.s32.totalorder %s24, 0
      %p66 = por %p64, %p65
      %p67 = scmp.ne.s32.totalorder %s53, %s54
      %p68 = scmp.eq.s32.totalorder %s25, 3
      %p69 = por %p67, %p68
      %p71 = scmp.ne.s32.totalorder %s54, %s70
      %p72 = scmp.eq.s32.totalorder %s25, 0
      %p73 = por %p71, %p72
      %s75 = sadd.s32 %s74, 1
      %p78 = scmp.eq.s32.totalorder %s19, 3
      %p79 = scmp.ne.s32.totalorder %s74, %s76
      %p80 = scmp.eq.s32.totalorder %s19, 0
      %p81 = por %p79, %p80
      %p82 = scmp.ne.s32.totalorder %s74, %s76
      %p83 = scmp.eq.s32.totalorder %s24, 3
      %p84 = por %p82, %p83
      %p85 = scmp.ne.s32.totalorder %s76, %s77
      %p86 = scmp.eq.s32.totalorder %s24, 0
      %p87 = por %p85, %p86
      %p88 = scmp.ne.s32.totalorder %s76, %s77
      %p89 = scmp.eq.s32.totalorder %s25, 3
      %p90 = por %p88, %p89
      %p92 = scmp.ne.s32.totalorder %s77, %s91
      %p93 = scmp.eq.s32.totalorder %s25, 0
      %p94 = por %p92, %p93
      %s96 = sadd.s32 %s95, 1
      %p99 = scmp.eq.s32.totalorder %s19, 3
      %p100 = scmp.ne.s32.totalorder %s95, %s97
      %p101 = scmp.eq.s32.totalorder %s19, 0
      %p102 = por %p100, %p101
      %p103 = scmp.ne.s32.totalorder %s95, %s97
      %p104 = scmp.eq.s32.totalorder %s24, 3
      %p105 = por %p103, %p104
      %p106 = scmp.ne.s32.totalorder %s97, %s98
      %p107 = scmp.eq.s32.totalorder %s24, 0
      %p108 = por %p106, %p107
      %p109 = scmp.ne.s32.totalorder %s97, %s98
      %p110 = scmp.eq.s32.totalorder %s25, 3
      %p111 = por %p109, %p110
      %p113 = scmp.ne.s32.totalorder %s98, %s112
      %p114 = scmp.eq.s32.totalorder %s25, 0
      %p115 = por %p113, %p114
      %s117 = sadd.s32 %s116, 1
      %p120 = scmp.eq.s32.totalorder %s19, 3
      %p121 = scmp.ne.s32.totalorder %s116, %s118
      %p122 = scmp.eq.s32.totalorder %s19, 0
      %p123 = por %p121, %p122
      %p124 = scmp.ne.s32.totalorder %s116, %s118
      %p125 = scmp.eq.s32.totalorder %s24, 3
      %p126 = por %p124, %p125
      %p127 = scmp.ne.s32.totalorder %s118, %s119
      %p128 = scmp.eq.s32.totalorder %s24, 0
      %p129 = por %p127, %p128
      %p130 = scmp.ne.s32.totalorder %s118, %s119
      %p131 = scmp.eq.s32.totalorder %s25, 3
      %p132 = por %p130, %p131
      %p134 = scmp.ne.s32.totalorder %s119, %s133
      %p135 = scmp.eq.s32.totalorder %s25, 0
      %p136 = por %p134, %p135
      %s137 = ssub.s32 %s26, %s45
      %s138 = ssub.s32 %s28, %s37
      %s139 = sor.u32 %s137, %s138
      %s140 = ssub.s32 %s27, %s41
      %s141 = sor.u32 %s139, %s140
      %p142 = scmp.eq.s32.totalorder %s141, 0
      %s144 = sadd.s32 %s143, 1
      %s145 = scalar_select %p142, %s143, %s144
      %p148 = pneg %p142
      %p149 = scmp.eq.s32.totalorder %s19, 3
      %p150 = por %p148, %p149
      %p151 = scmp.ne.s32.totalorder %s143, %s146
      %p152 = scmp.eq.s32.totalorder %s19, 0
      %p153 = por %p151, %p152
      %p154 = scmp.ne.s32.totalorder %s143, %s146
      %p155 = scmp.eq.s32.totalorder %s24, 3
      %p156 = por %p154, %p155
      %p157 = scmp.ne.s32.totalorder %s146, %s147
      %p158 = scmp.eq.s32.totalorder %s24, 0
      %p159 = por %p157, %p158
      %p160 = scmp.ne.s32.totalorder %s146, %s147
      %p161 = scmp.eq.s32.totalorder %s25, 3
      %p162 = por %p160, %p161
      %p164 = scmp.ne.s32.totalorder %s147, %s163
      %p165 = scmp.eq.s32.totalorder %s25, 0
      %p166 = por %p164, %p165
      %p167 = scmp.le.s32.totalorder 1, %s19
      %p168 = scmp.lt.s32.totalorder %s19, 5
      %p169 = pnand %p167, %p168
      %p170 = pneg %p169
      // Predicated region
      $region9: #{tpu_custom_call.1} parent=5 // pred_check
        _
      $region10: #{tpu_custom_call.1} parent=5 // pred_check_branch
        %172 = sbr.rel (%p169) target = $region12
      $region11: #{tpu_custom_call.1} parent=5 // pred_region
        %s173 = ssub.s32 %s19, 1
        // Predicated region
        $region13: #{tpu_custom_call.1} parent=11 // pred_check
          %p174 = pneg %p87
        $region14: #{tpu_custom_call.1} parent=11 // pred_check_branch
          %176 = sbr.rel (%p174) target = $region16
        $region15: #{tpu_custom_call.1} parent=11 // pred_region
          %s178 = ssub.s32 16, 16
          %179 = vsyncadd [#allocation5], %s178
          %s181 = sshll.u32 %s1, 4
          %s182 = int_to_ptr.vmem [resolvable:$true] %s181
          %184 = dma.vmem_to_smem %s182, 16, [#allocation6], [#allocation5]
        $region16: #{tpu_custom_call.1} parent=11 // pred_fallthru
          _
        // Predicated region
        $region17: #{tpu_custom_call.1} parent=11 // pred_check
          %p185 = pneg %p108
        $region18: #{tpu_custom_call.1} parent=11 // pred_check_branch
          %187 = sbr.rel (%p185) target = $region20
        $region19: #{tpu_custom_call.1} parent=11 // pred_region
          %s189 = ssub.s32 16, 16
          %190 = vsyncadd [#allocation8], %s189
          %s192 = sshll.u32 %s2, 4
          %s193 = int_to_ptr.vmem [resolvable:$true] %s192
          %195 = dma.vmem_to_smem %s193, 16, [#allocation7], [#allocation8]
        $region20: #{tpu_custom_call.1} parent=11 // pred_fallthru
          _
        // Predicated region
        $region21: #{tpu_custom_call.1} parent=11 // pred_check
          %p196 = pneg %p129
        $region22: #{tpu_custom_call.1} parent=11 // pred_check_branch
          %198 = sbr.rel (%p196) target = $region24
        $region23: #{tpu_custom_call.1} parent=11 // pred_region
          %s200 = ssub.s32 512, 512
          %201 = vsyncadd [#allocation10], %s200
          %s202 = sshll.u32 [#allocation9], 4
          %s203 = int_to_ptr.vmem [resolvable:$true] %s202
          %208 = dma.hbm_to_vmem [thread:$0]  %s3, 512, %s203, [#allocation10], 128, 128, 8
        $region24: #{tpu_custom_call.1} parent=11 // pred_fallthru
          _
      $region12: #{tpu_custom_call.1} parent=5 // pred_fallthru
        _
      %p209 = scmp.lt.s32.totalorder %s19, 4
      // Predicated region
      $region25: #{tpu_custom_call.1} parent=5 // pred_check
        %p210 = pneg %p209
      $region26: #{tpu_custom_call.1} parent=5 // pred_check_branch
        %212 = sbr.rel (%p210) target = $region28
      $region27: #{tpu_custom_call.1} parent=5 // pred_region
        // Predicated region
        $region29: #{tpu_custom_call.1} parent=27 // pred_check
          %p213 = pneg %p60
        $region30: #{tpu_custom_call.1} parent=27 // pred_check_branch
          %215 = sbr.rel (%p213) target = $region32
        $region31: #{tpu_custom_call.1} parent=27 // pred_region
          %s216 = sand.u32 %s50, 1
          %s217 = scalar_lea.sflag [#allocation3], %s216
          %s218 = sand.u32 %s50, 1
          %s219 = smul.addr %s218, 32
          %s220 = scalar_lea.vmem [#allocation2], %s219
          %s222 = ssub.s32 512, 512
          %223 = vsyncadd %s217, %s222
          %s224 = smul.addr %s26, 4
          %s225 = sadd.s32 %s27, %s224
          %s226 = smul.addr %s225, 128
          %s227 = scalar_lea.hbm %s0, %s226
          %s228 = sshll.u32 %s220, 4
          %s229 = int_to_ptr.vmem [resolvable:$true] %s228
          %234 = dma.hbm_to_vmem [thread:$0]  %s227, 512, %s229, %s217, 128, 128, 8
        $region32: #{tpu_custom_call.1} parent=27 // pred_fallthru
          _
      $region28: #{tpu_custom_call.1} parent=5 // pred_fallthru
        _
      %p235 = scmp.le.s32.totalorder 1, %s19
      %p236 = scmp.lt.s32.totalorder %s19, 5
      %p237 = pnand %p235, %p236
      %p238 = pneg %p237
      // Predicated region
      $region33: #{tpu_custom_call.1} parent=5 // pred_check
        _
      $region34: #{tpu_custom_call.1} parent=5 // pred_check_branch
        %240 = sbr.rel (%p237) target = $region36
      $region35: #{tpu_custom_call.1} parent=5 // pred_region
        %s241 = ssub.s32 %s19, 1
        %s242 = sand.u32 %s53, 1
        %s243 = scalar_lea.sflag [#allocation3], %s242
        %s244 = sand.u32 %s53, 1
        %s245 = smul.addr %s244, 32
        %s246 = scalar_lea.vmem [#allocation2], %s245
        // Predicated region
        $region37: #{tpu_custom_call.1} parent=35 // pred_check
          %p247 = pneg %p66
        $region38: #{tpu_custom_call.1} parent=35 // pred_check_branch
          %249 = sbr.rel (%p247) target = $region40
        $region39: #{tpu_custom_call.1} parent=35 // pred_region
          %250 = dma.done %s243, 512
        $region40: #{tpu_custom_call.1} parent=35 // pred_fallthru
          _
        // Predicated region
        $region41: #{tpu_custom_call.1} parent=35 // pred_check
          %p251 = pneg %p87
        $region42: #{tpu_custom_call.1} parent=35 // pred_check_branch
          %253 = sbr.rel (%p251) target = $region44
        $region43: #{tpu_custom_call.1} parent=35 // pred_region
          %254 = dma.done [#allocation5], 16
        $region44: #{tpu_custom_call.1} parent=35 // pred_fallthru
          _
        // Predicated region
        $region45: #{tpu_custom_call.1} parent=35 // pred_check
          %p255 = pneg %p108
        $region46: #{tpu_custom_call.1} parent=35 // pred_check_branch
          %257 = sbr.rel (%p255) target = $region48
        $region47: #{tpu_custom_call.1} parent=35 // pred_region
          %258 = dma.done [#allocation8], 16
        $region48: #{tpu_custom_call.1} parent=35 // pred_fallthru
          _
        // Predicated region
        $region49: #{tpu_custom_call.1} parent=35 // pred_check
          %p259 = pneg %p129
        $region50: #{tpu_custom_call.1} parent=35 // pred_check_branch
          %261 = sbr.rel (%p259) target = $region52
        $region51: #{tpu_custom_call.1} parent=35 // pred_region
          %262 = dma.done [#allocation10], 512
        $region52: #{tpu_custom_call.1} parent=35 // pred_fallthru
          _
        %263 = sfence
        %s264 = sand.u32 %s53, 1
        %s265 = scalar_lea.sflag [#allocation3], %s264
        %s266 = sand.u32 %s53, 1
        %s267 = smul.addr %s266, 32
        %s268 = scalar_lea.vmem [#allocation2], %s267
        %p269 = pneg %p66
        %p270 = pneg %p63
        %p271 = pneg %p87
        %p272 = pneg %p84
        %p273 = pneg %p108
        %p274 = pneg %p105
        %p275 = pneg %p129
        %p276 = pneg %p126
        %p277 = pneg %p159
        %p278 = pneg %p156
        %s279 = sand.u32 %s146, 1
        %s280 = scalar_lea.sflag [#allocation4], %s279
        %s281 = sand.u32 %s146, 1
        %s282 = smul.addr %s281, 32
        %s283 = scalar_lea.vmem [#allocation11], %s282
        %s284 = smul.u32 4, %s31
        %v285 = vld [vmem:[#allocation9] sm:$0xff]
        %v286 = vld [vmem:[#allocation9 + $0x8] sm:$0xff]
        %v287 = vld [vmem:[#allocation9 + $0x10] sm:$0xff]
        %v288 = vld [vmem:[#allocation9 + $0x18] sm:$0xff]
        %s289 = smul.u32 %s31, 4
        %s290 = smul.u32 %s31, 16
        %v291 = vld [vmem:[%s246] sm:$0xff]
        %s292 = sld [smem:[#allocation6 + %s290]]
        %v293 = vstv %s292
        %v294 = vmul.f32 %v291, %v293
        %s295 = scalar_lea.vmem %s246, 8 [#allocation2]
        %v296 = vld [vmem:[%s295] sm:$0xff]
        %s297 = sadd.s32 %s290, 1
        %s298 = sld [smem:[#allocation6 + %s297]]
        %v299 = vstv %s298
        %v300 = vmul.f32 %v296, %v299
        %v301 = vadd.f32 %v294, %v300
        %s302 = scalar_lea.vmem %s246, 16 [#allocation2]
        %v303 = vld [vmem:[%s302] sm:$0xff]
        %s304 = sadd.s32 %s290, 2
        %s305 = sld [smem:[#allocation6 + %s304]]
        %v306 = vstv %s305
        %v307 = vmul.f32 %v303, %v306
        %v308 = vadd.f32 %v301, %v307
        %s309 = scalar_lea.vmem %s246, 24 [#allocation2]
        %v310 = vld [vmem:[%s309] sm:$0xff]
        %s311 = sadd.s32 %s290, 3
        %s312 = sld [smem:[#allocation6 + %s311]]
        %v313 = vstv %s312
        %v314 = vmul.f32 %v310, %v313
        %v315 = vadd.f32 %v308, %v314
        %s316 = sld [smem:[#allocation7 + %s289]]
        %v317 = vstv %s316
        %v318 = vadd.f32 %v315, %v317
        %vm319 = vcmask 261120
        %v321 = vsel %vm319, %v318, 0
        %323 = vmatprep.subr.mxu0 0.0
        %324 = vmatpush1.msra.mxu0 %v285
        %325 = vmatprep.subr.mxu0 0.0
        %326 = vmatpush1.msra.mxu0 %v286
        %327 = vmatprep.subr.mxu0 0.0
        %328 = vmatpush1.msra.mxu0 %v287
        %329 = vmatprep.subr.mxu0 0.0
        %330 = vmatpush1.msra.mxu0 %v288
        %331 = vmatprep.subr.mxu0 0.0
        %332 = vmatpush1.msra.mxu0 0.0
        %333 = vmatprep.subr.mxu0 0.0
        %334 = vmatpush1.msra.mxu0 0.0
        %335 = vmatprep.subr.mxu0 0.0
        %336 = vmatpush1.msra.mxu0 0.0
        %337 = vmatprep.subr.mxu0 0.0
        %338 = vmatpush1.msra.mxu0 0.0
        %339 = vmatprep.subr.mxu0 0.0
        %340 = vmatpush1.msra.mxu0 0.0
        %341 = vmatprep.subr.mxu0 0.0
        %342 = vmatpush1.msra.mxu0 0.0
        %343 = vmatprep.subr.mxu0 0.0
        %344 = vmatpush1.msra.mxu0 0.0
        %345 = vmatprep.subr.mxu0 0.0
        %346 = vmatpush1.msra.mxu0 0.0
        %347 = vmatprep.subr.mxu0 0.0
        %348 = vmatpush1.msra.mxu0 0.0
        %349 = vmatprep.subr.mxu0 0.0
        %350 = vmatpush1.msra.mxu0 0.0
        %351 = vmatprep.subr.mxu0 0.0
        %352 = vmatpush1.msra.mxu0 0.0
        %353 = vmatprep.subr.mxu0 0.0
        %354 = vmatpush1.msra.mxu0 0.0
        %355 = vmatprep.subr.mxu0 0.0
        %356 = vmatpush1.msra.mxu0 0.0
        %357 = vmatprep.subr.mxu0 0.0
        %358 = vmatpush1.msra.mxu0 0.0
        %359 = vmatprep.subr.mxu0 0.0
        %360 = vmatpush1.msra.mxu0 0.0
        %361 = vmatprep.subr.mxu0 0.0
        %362 = vmatpush1.msra.mxu0 0.0
        %363 = vmatprep.subr.mxu0 0.0
        %364 = vmatpush1.msra.mxu0 0.0
        %365 = vmatprep.subr.mxu0 0.0
        %366 = vmatpush1.msra.mxu0 0.0
        %367 = vmatprep.subr.mxu0 0.0
        %368 = vmatpush1.msra.mxu0 0.0
        %369 = vmatprep.subr.mxu0 0.0
        %370 = vmatpush1.msra.mxu0 0.0
        %371 = vmatprep.subr.mxu0 0.0
        %372 = vmatpush1.msra.mxu0 0.0
        %373 = vmatprep.subr.mxu0 0.0
        %374 = vmatpush1.msra.mxu0 0.0
        %375 = vmatprep.subr.mxu0 0.0
        %376 = vmatpush1.msra.mxu0 0.0
        %377 = vmatprep.subr.mxu0 0.0
        %378 = vmatpush1.msra.mxu0 0.0
        %379 = vmatprep.subr.mxu0 0.0
        %380 = vmatpush1.msra.mxu0 0.0
        %381 = vmatprep.subr.mxu0 0.0
        %382 = vmatpush1.msra.mxu0 0.0
        %383 = vmatprep.subr.mxu0 0.0
        %384 = vmatpush1.msra.mxu0 0.0
        %385 = vmatprep.subr.mxu0 0.0
        %386 = vmatpush1.msra.mxu0 0.0
        %387 = vmatprep.mubr.f32.mxu0 0.0
        %388 = vmatmul.mubr.f32.gmra.mrb[0].mxu0 %v321
        %v389 = vpop.f32.mrb[0].mxu0
        %v390 = vadd.f32 0.0, %v389
        %v391 = vpop.f32.mrb[0].mxu0
        %392 = vdwg.mxu0
        %393 = vst [vmem:[%s283] sm:$0xff] %v390
        %s394 = sadd.s32 %s289, 1
        %s395 = smul.u32 %s394, 4
        %v396 = vld [vmem:[%s246] sm:$0xff]
        %s397 = sld [smem:[#allocation6 + %s395]]
        %v398 = vstv %s397
        %v399 = vmul.f32 %v396, %v398
        %v400 = vld [vmem:[%s295] sm:$0xff]
        %s401 = sadd.s32 %s395, 1
        %s402 = sld [smem:[#allocation6 + %s401]]
        %v403 = vstv %s402
        %v404 = vmul.f32 %v400, %v403
        %v405 = vadd.f32 %v399, %v404
        %v406 = vld [vmem:[%s302] sm:$0xff]
        %s407 = sadd.s32 %s395, 2
        %s408 = sld [smem:[#allocation6 + %s407]]
        %v409 = vstv %s408
        %v410 = vmul.f32 %v406, %v409
        %v411 = vadd.f32 %v405, %v410
        %v412 = vld [vmem:[%s309] sm:$0xff]
        %s413 = sadd.s32 %s395, 3
        %s414 = sld [smem:[#allocation6 + %s413]]
        %v415 = vstv %s414
        %v416 = vmul.f32 %v412, %v415
        %v417 = vadd.f32 %v411, %v416
        %s418 = sld [smem:[#allocation7 + %s394]]
        %v419 = vstv %s418
        %v420 = vadd.f32 %v417, %v419
        %v422 = vsel %vm319, %v420, 0
        %424 = vmatprep.subr.mxu0 0.0
        %425 = vmatpush1.msra.mxu0 %v285
        %426 = vmatprep.subr.mxu0 0.0
        %427 = vmatpush1.msra.mxu0 %v286
        %428 = vmatprep.subr.mxu0 0.0
        %429 = vmatpush1.msra.mxu0 %v287
        %430 = vmatprep.subr.mxu0 0.0
        %431 = vmatpush1.msra.mxu0 %v288
        %432 = vmatprep.subr.mxu0 0.0
        %433 = vmatpush1.msra.mxu0 0.0
        %434 = vmatprep.subr.mxu0 0.0
        %435 = vmatpush1.msra.mxu0 0.0
        %436 = vmatprep.subr.mxu0 0.0
        %437 = vmatpush1.msra.mxu0 0.0
        %438 = vmatprep.subr.mxu0 0.0
        %439 = vmatpush1.msra.mxu0 0.0
        %440 = vmatprep.subr.mxu0 0.0
        %441 = vmatpush1.msra.mxu0 0.0
        %442 = vmatprep.subr.mxu0 0.0
        %443 = vmatpush1.msra.mxu0 0.0
        %444 = vmatprep.subr.mxu0 0.0
        %445 = vmatpush1.msra.mxu0 0.0
        %446 = vmatprep.subr.mxu0 0.0
        %447 = vmatpush1.msra.mxu0 0.0
        %448 = vmatprep.subr.mxu0 0.0
        %449 = vmatpush1.msra.mxu0 0.0
        %450 = vmatprep.subr.mxu0 0.0
        %451 = vmatpush1.msra.mxu0 0.0
        %452 = vmatprep.subr.mxu0 0.0
        %453 = vmatpush1.msra.mxu0 0.0
        %454 = vmatprep.subr.mxu0 0.0
        %455 = vmatpush1.msra.mxu0 0.0
        %456 = vmatprep.subr.mxu0 0.0
        %457 = vmatpush1.msra.mxu0 0.0
        %458 = vmatprep.subr.mxu0 0.0
        %459 = vmatpush1.msra.mxu0 0.0
        %460 = vmatprep.subr.mxu0 0.0
        %461 = vmatpush1.msra.mxu0 0.0
        %462 = vmatprep.subr.mxu0 0.0
        %463 = vmatpush1.msra.mxu0 0.0
        %464 = vmatprep.subr.mxu0 0.0
        %465 = vmatpush1.msra.mxu0 0.0
        %466 = vmatprep.subr.mxu0 0.0
        %467 = vmatpush1.msra.mxu0 0.0
        %468 = vmatprep.subr.mxu0 0.0
        %469 = vmatpush1.msra.mxu0 0.0
        %470 = vmatprep.subr.mxu0 0.0
        %471 = vmatpush1.msra.mxu0 0.0
        %472 = vmatprep.subr.mxu0 0.0
        %473 = vmatpush1.msra.mxu0 0.0
        %474 = vmatprep.subr.mxu0 0.0
        %475 = vmatpush1.msra.mxu0 0.0
        %476 = vmatprep.subr.mxu0 0.0
        %477 = vmatpush1.msra.mxu0 0.0
        %478 = vmatprep.subr.mxu0 0.0
        %479 = vmatpush1.msra.mxu0 0.0
        %480 = vmatprep.subr.mxu0 0.0
        %481 = vmatpush1.msra.mxu0 0.0
        %482 = vmatprep.subr.mxu0 0.0
        %483 = vmatpush1.msra.mxu0 0.0
        %484 = vmatprep.subr.mxu0 0.0
        %485 = vmatpush1.msra.mxu0 0.0
        %486 = vmatprep.subr.mxu0 0.0
        %487 = vmatpush1.msra.mxu0 0.0
        %488 = vmatprep.mubr.f32.mxu0 0.0
        %489 = vmatmul.mubr.f32.gmra.mrb[0].mxu0 %v422
        %v490 = vpop.f32.mrb[0].mxu0
        %v491 = vadd.f32 0.0, %v490
        %v492 = vpop.f32.mrb[0].mxu0
        %493 = vdwg.mxu0
        %s494 = scalar_lea.vmem %s283, 8 [#allocation11]
        %495 = vst [vmem:[%s494] sm:$0xff] %v491
        %s496 = sadd.s32 %s289, 2
        %s497 = smul.u32 %s496, 4
        %v498 = vld [vmem:[%s246] sm:$0xff]
        %s499 = sld [smem:[#allocation6 + %s497]]
        %v500 = vstv %s499
        %v501 = vmul.f32 %v498, %v500
        %v502 = vld [vmem:[%s295] sm:$0xff]
        %s503 = sadd.s32 %s497, 1
        %s504 = sld [smem:[#allocation6 + %s503]]
        %v505 = vstv %s504
        %v506 = vmul.f32 %v502, %v505
        %v507 = vadd.f32 %v501, %v506
        %v508 = vld [vmem:[%s302] sm:$0xff]
        %s509 = sadd.s32 %s497, 2
        %s510 = sld [smem:[#allocation6 + %s509]]
        %v511 = vstv %s510
        %v512 = vmul.f32 %v508, %v511
        %v513 = vadd.f32 %v507, %v512
        %v514 = vld [vmem:[%s309] sm:$0xff]
        %s515 = sadd.s32 %s497, 3
        %s516 = sld [smem:[#allocation6 + %s515]]
        %v517 = vstv %s516
        %v518 = vmul.f32 %v514, %v517
        %v519 = vadd.f32 %v513, %v518
        %s520 = sld [smem:[#allocation7 + %s496]]
        %v521 = vstv %s520
        %v522 = vadd.f32 %v519, %v521
        %v524 = vsel %vm319, %v522, 0
        %526 = vmatprep.subr.mxu0 0.0
        %527 = vmatpush1.msra.mxu0 %v285
        %528 = vmatprep.subr.mxu0 0.0
        %529 = vmatpush1.msra.mxu0 %v286
        %530 = vmatprep.subr.mxu0 0.0
        %531 = vmatpush1.msra.mxu0 %v287
        %532 = vmatprep.subr.mxu0 0.0
        %533 = vmatpush1.msra.mxu0 %v288
        %534 = vmatprep.subr.mxu0 0.0
        %535 = vmatpush1.msra.mxu0 0.0
        %536 = vmatprep.subr.mxu0 0.0
        %537 = vmatpush1.msra.mxu0 0.0
        %538 = vmatprep.subr.mxu0 0.0
        %539 = vmatpush1.msra.mxu0 0.0
        %540 = vmatprep.subr.mxu0 0.0
        %541 = vmatpush1.msra.mxu0 0.0
        %542 = vmatprep.subr.mxu0 0.0
        %543 = vmatpush1.msra.mxu0 0.0
        %544 = vmatprep.subr.mxu0 0.0
        %545 = vmatpush1.msra.mxu0 0.0
        %546 = vmatprep.subr.mxu0 0.0
        %547 = vmatpush1.msra.mxu0 0.0
        %548 = vmatprep.subr.mxu0 0.0
        %549 = vmatpush1.msra.mxu0 0.0
        %550 = vmatprep.subr.mxu0 0.0
        %551 = vmatpush1.msra.mxu0 0.0
        %552 = vmatprep.subr.mxu0 0.0
        %553 = vmatpush1.msra.mxu0 0.0
        %554 = vmatprep.subr.mxu0 0.0
        %555 = vmatpush1.msra.mxu0 0.0
        %556 = vmatprep.subr.mxu0 0.0
        %557 = vmatpush1.msra.mxu0 0.0
        %558 = vmatprep.subr.mxu0 0.0
        %559 = vmatpush1.msra.mxu0 0.0
        %560 = vmatprep.subr.mxu0 0.0
        %561 = vmatpush1.msra.mxu0 0.0
        %562 = vmatprep.subr.mxu0 0.0
        %563 = vmatpush1.msra.mxu0 0.0
        %564 = vmatprep.subr.mxu0 0.0
        %565 = vmatpush1.msra.mxu0 0.0
        %566 = vmatprep.subr.mxu0 0.0
        %567 = vmatpush1.msra.mxu0 0.0
        %568 = vmatprep.subr.mxu0 0.0
        %569 = vmatpush1.msra.mxu0 0.0
        %570 = vmatprep.subr.mxu0 0.0
        %571 = vmatpush1.msra.mxu0 0.0
        %572 = vmatprep.subr.mxu0 0.0
        %573 = vmatpush1.msra.mxu0 0.0
        %574 = vmatprep.subr.mxu0 0.0
        %575 = vmatpush1.msra.mxu0 0.0
        %576 = vmatprep.subr.mxu0 0.0
        %577 = vmatpush1.msra.mxu0 0.0
        %578 = vmatprep.subr.mxu0 0.0
        %579 = vmatpush1.msra.mxu0 0.0
        %580 = vmatprep.subr.mxu0 0.0
        %581 = vmatpush1.msra.mxu0 0.0
        %582 = vmatprep.subr.mxu0 0.0
        %583 = vmatpush1.msra.mxu0 0.0
        %584 = vmatprep.subr.mxu0 0.0
        %585 = vmatpush1.msra.mxu0 0.0
        %586 = vmatprep.subr.mxu0 0.0
        %587 = vmatpush1.msra.mxu0 0.0
        %588 = vmatprep.subr.mxu0 0.0
        %589 = vmatpush1.msra.mxu0 0.0
        %590 = vmatprep.mubr.f32.mxu0 0.0
        %591 = vmatmul.mubr.f32.gmra.mrb[0].mxu0 %v524
        %v592 = vpop.f32.mrb[0].mxu0
        %v593 = vadd.f32 0.0, %v592
        %v594 = vpop.f32.mrb[0].mxu0
        %595 = vdwg.mxu0
        %s596 = scalar_lea.vmem %s283, 16 [#allocation11]
        %597 = vst [vmem:[%s596] sm:$0xff] %v593
        %s598 = sadd.s32 %s289, 3
        %s599 = smul.u32 %s598, 4
        %v600 = vld [vmem:[%s246] sm:$0xff]
        %s601 = sld [smem:[#allocation6 + %s599]]
        %v602 = vstv %s601
        %v603 = vmul.f32 %v600, %v602
        %v604 = vld [vmem:[%s295] sm:$0xff]
        %s605 = sadd.s32 %s599, 1
        %s606 = sld [smem:[#allocation6 + %s605]]
        %v607 = vstv %s606
        %v608 = vmul.f32 %v604, %v607
        %v609 = vadd.f32 %v603, %v608
        %v610 = vld [vmem:[%s302] sm:$0xff]
        %s611 = sadd.s32 %s599, 2
        %s612 = sld [smem:[#allocation6 + %s611]]
        %v613 = vstv %s612
        %v614 = vmul.f32 %v610, %v613
        %v615 = vadd.f32 %v609, %v614
        %v616 = vld [vmem:[%s309] sm:$0xff]
        %s617 = sadd.s32 %s599, 3
        %s618 = sld [smem:[#allocation6 + %s617]]
        %v619 = vstv %s618
        %v620 = vmul.f32 %v616, %v619
        %v621 = vadd.f32 %v615, %v620
        %s622 = sld [smem:[#allocation7 + %s598]]
        %v623 = vstv %s622
        %v624 = vadd.f32 %v621, %v623
        %v626 = vsel %vm319, %v624, 0
        %628 = vmatprep.subr.mxu0 0.0
        %629 = vmatpush1.msra.mxu0 %v285
        %630 = vmatprep.subr.mxu0 0.0
        %631 = vmatpush1.msra.mxu0 %v286
        %632 = vmatprep.subr.mxu0 0.0
        %633 = vmatpush1.msra.mxu0 %v287
        %634 = vmatprep.subr.mxu0 0.0
        %635 = vmatpush1.msra.mxu0 %v288
        %636 = vmatprep.subr.mxu0 0.0
        %637 = vmatpush1.msra.mxu0 0.0
        %638 = vmatprep.subr.mxu0 0.0
        %639 = vmatpush1.msra.mxu0 0.0
        %640 = vmatprep.subr.mxu0 0.0
        %641 = vmatpush1.msra.mxu0 0.0
        %642 = vmatprep.subr.mxu0 0.0
        %643 = vmatpush1.msra.mxu0 0.0
        %644 = vmatprep.subr.mxu0 0.0
        %645 = vmatpush1.msra.mxu0 0.0
        %646 = vmatprep.subr.mxu0 0.0
        %647 = vmatpush1.msra.mxu0 0.0
        %648 = vmatprep.subr.mxu0 0.0
        %649 = vmatpush1.msra.mxu0 0.0
        %650 = vmatprep.subr.mxu0 0.0
        %651 = vmatpush1.msra.mxu0 0.0
        %652 = vmatprep.subr.mxu0 0.0
        %653 = vmatpush1.msra.mxu0 0.0
        %654 = vmatprep.subr.mxu0 0.0
        %655 = vmatpush1.msra.mxu0 0.0
        %656 = vmatprep.subr.mxu0 0.0
        %657 = vmatpush1.msra.mxu0 0.0
        %658 = vmatprep.subr.mxu0 0.0
        %659 = vmatpush1.msra.mxu0 0.0
        %660 = vmatprep.subr.mxu0 0.0
        %661 = vmatpush1.msra.mxu0 0.0
        %662 = vmatprep.subr.mxu0 0.0
        %663 = vmatpush1.msra.mxu0 0.0
        %664 = vmatprep.subr.mxu0 0.0
        %665 = vmatpush1.msra.mxu0 0.0
        %666 = vmatprep.subr.mxu0 0.0
        %667 = vmatpush1.msra.mxu0 0.0
        %668 = vmatprep.subr.mxu0 0.0
        %669 = vmatpush1.msra.mxu0 0.0
        %670 = vmatprep.subr.mxu0 0.0
        %671 = vmatpush1.msra.mxu0 0.0
        %672 = vmatprep.subr.mxu0 0.0
        %673 = vmatpush1.msra.mxu0 0.0
        %674 = vmatprep.subr.mxu0 0.0
        %675 = vmatpush1.msra.mxu0 0.0
        %676 = vmatprep.subr.mxu0 0.0
        %677 = vmatpush1.msra.mxu0 0.0
        %678 = vmatprep.subr.mxu0 0.0
        %679 = vmatpush1.msra.mxu0 0.0
        %680 = vmatprep.subr.mxu0 0.0
        %681 = vmatpush1.msra.mxu0 0.0
        %682 = vmatprep.subr.mxu0 0.0
        %683 = vmatpush1.msra.mxu0 0.0
        %684 = vmatprep.subr.mxu0 0.0
        %685 = vmatpush1.msra.mxu0 0.0
        %686 = vmatprep.subr.mxu0 0.0
        %687 = vmatpush1.msra.mxu0 0.0
        %688 = vmatprep.subr.mxu0 0.0
        %689 = vmatpush1.msra.mxu0 0.0
        %690 = vmatprep.subr.mxu0 0.0
        %691 = vmatpush1.msra.mxu0 0.0
        %692 = vmatprep.mubr.f32.mxu0 0.0
        %693 = vmatmul.mubr.f32.gmra.mrb[0].mxu0 %v626
        %v694 = vpop.f32.mrb[0].mxu0
        %v695 = vadd.f32 0.0, %v694
        %v696 = vpop.f32.mrb[0].mxu0
        %697 = vdwg.mxu0
        %s698 = scalar_lea.vmem %s283, 24 [#allocation11]
        %699 = vst [vmem:[%s698] sm:$0xff] %v695
        %s700 = sand.u32 %s146, 1
        %s701 = scalar_lea.sflag [#allocation4], %s700
        %s702 = sand.u32 %s146, 1
        %s703 = smul.addr %s702, 32
        %s704 = scalar_lea.vmem [#allocation11], %s703
        // Predicated region
        $region53: #{tpu_custom_call.1} parent=35 // pred_check
          %p705 = pneg %p156
        $region54: #{tpu_custom_call.1} parent=35 // pred_check_branch
          %707 = sbr.rel (%p705) target = $region56
        $region55: #{tpu_custom_call.1} parent=35 // pred_region
          %s708 = smul.u32 4, %s31
          %s710 = ssub.s32 512, 512
          %711 = vsyncadd %s701, %s710
          %s712 = sadd.s32 %s30, %s708
          %s713 = smul.addr %s29, 8
          %s714 = sadd.s32 %s712, %s713
          %s715 = smul.addr %s714, 128
          %s716 = scalar_lea.hbm %s4, %s715
          %s717 = sshll.u32 %s704, 4
          %s718 = int_to_ptr.vmem [resolvable:$true] %s717
          %723 = dma.vmem_to_hbm [thread:$0]  %s718, 512, %s716, %s701, 128, 128, 8
        $region56: #{tpu_custom_call.1} parent=35 // pred_fallthru
          _
      $region36: #{tpu_custom_call.1} parent=5 // pred_fallthru
        _
      %p724 = scmp.le.s32.totalorder 2, %s19
      // Predicated region
      $region57: #{tpu_custom_call.1} parent=5 // pred_check
        %p725 = pneg %p724
      $region58: #{tpu_custom_call.1} parent=5 // pred_check_branch
        %727 = sbr.rel (%p725) target = $region60
      $region59: #{tpu_custom_call.1} parent=5 // pred_region
        %s728 = ssub.s32 %s19, 2
        // Predicated region
        $region61: #{tpu_custom_call.1} parent=59 // pred_check
          %p729 = pneg %p162
        $region62: #{tpu_custom_call.1} parent=59 // pred_check_branch
          %731 = sbr.rel (%p729) target = $region64
        $region63: #{tpu_custom_call.1} parent=59 // pred_region
          %s732 = sand.u32 %s147, 1
          %s733 = scalar_lea.sflag [#allocation4], %s732
          %s734 = sand.u32 %s147, 1
          %s735 = smul.addr %s734, 32
          %s736 = scalar_lea.vmem [#allocation11], %s735
          %737 = dma.done %s733, 512
        $region64: #{tpu_custom_call.1} parent=59 // pred_fallthru
          _
      $region60: #{tpu_custom_call.1} parent=5 // pred_fallthru
        _
    $region6: #{tpu_custom_call.1} parent=1 // loop_footer
      %s23 = sadd.s32 1, %s19
    $region7: #{tpu_custom_call.1} parent=1 // loop_footer_branch
      %18 = sbr.rel target = $region3
    $region8: #{tpu_custom_call.1} parent=1 // loop_exit
      _
    %738 = vsyncpa [#allocation3], 1
    %s739 = scalar_lea.sflag [#allocation3], 1
    %740 = vsyncpa %s739, 1
    %741 = vsyncpa [#allocation10], 1
    %742 = vsyncpa [#allocation4], 1
    %s743 = scalar_lea.sflag [#allocation4], 1
    %744 = vsyncpa %s743, 1
    %745 = vsyncpa [#allocation5], 1
    %s746 = scalar_lea.sflag [#allocation5], 1
    %747 = vsyncpa %s746, 1
    %748 = vsyncpa [#allocation8], 1

</llo_original>
